<compile_context>
chip_gen: v6e
topology: v6e:2x2x1
jax: 0.10.0
libtpu: 0.0.40
codegen_flags: <defaults>
</compile_context>

<pallas_src>
import functools

import jax
import jax.numpy as jnp
from jax import lax
from jax.experimental import pallas as pl
from jax.experimental.pallas import tpu as pltpu


def _round_up(x: int, m: int) -> int:
    return (x + m - 1) // m * m


def _xattn_kernel(a_ref, s_ref, m_ref, o_ref):
    # a_ref: (1, TF, D)     audio frame tile (new tile each grid step)
    # s_ref: (1, E_pad, D)  full (padded) score tile, resident across F tiles
    # m_ref: (1, 1, E_pad)  event mask, resident across F tiles
    # o_ref: (1, TF, E_pad) softmax output tile
    a = a_ref[0]                      # (TF, D)
    s = s_ref[0]                      # (E_pad, D)
    mask = m_ref[0]                   # (1, E_pad)

    # attn = audio @ score^T, contracting the last dim of both operands so the
    # MXU is fed directly (no materialized transpose of the score tile).
    attn = lax.dot_general(
        a, s,
        dimension_numbers=(((1,), (1,)), ((), ())),
        preferred_element_type=jnp.float32,
    )                                 # (TF, E_pad) f32

    # masked_fill(mask == 0, -inf), broadcast over frames.
    attn = jnp.where(mask == 0, -jnp.inf, attn)

    # Softmax over the event axis.
    mx = jnp.max(attn, axis=-1, keepdims=True)
    e = jnp.exp(attn - mx)
    denom = jnp.sum(e, axis=-1, keepdims=True)

    # EUP approx reciprocal + one Newton-Raphson step (~f32 accuracy).
    r = pl.reciprocal(denom, approx=True)
    r = r * (2.0 - denom * r)

    o_ref[0] = (e * r).astype(o_ref.dtype)


def cross_attn_matrix(audio_embs, score_embs, x_attn_mask=None, *,
                      compute_dtype=None, frame_tile=None):
    """Pallas implementation of CrossAttnMatrix.forward.

    compute_dtype: optionally cast the two embedding inputs (e.g. jnp.bfloat16)
      to halve HBM read traffic; the matmul still accumulates in f32 and the
      mask/softmax math stays in f32.
    """
    B, F, D = audio_embs.shape
    Bs, E, Ds = score_embs.shape
    assert B == Bs and D == Ds, "batch / dim mismatch"

    if x_attn_mask is None:
        x_attn_mask = jnp.ones((B, E), dtype=jnp.int32)

    if compute_dtype is not None:
        audio_embs = audio_embs.astype(compute_dtype)
        score_embs = score_embs.astype(compute_dtype)

    # ---- Pad the event axis to a lane-dense multiple of 128. Padded events
    # are masked (mask == 0) -> -inf -> exp 0, so the softmax is unchanged.
    E_pad = _round_up(E, 128)
    if E_pad != E:
        score_embs = jnp.pad(score_embs, ((0, 0), (0, E_pad - E), (0, 0)))
        x_attn_mask = jnp.pad(x_attn_mask, ((0, 0), (0, E_pad - E)))
    mask3 = x_attn_mask.reshape(B, 1, E_pad).astype(jnp.int32)

    # ---- Pick the frame tile so the double-buffered footprint (audio tile,
    # score tile, mask, output tile) stays ~<= 8 MiB: safe under the default
    # scoped-VMEM limit on v5e (16 MiB) and well inside v7x's 64 MiB physical.
    in_bytes = jnp.dtype(audio_embs.dtype).itemsize

    def footprint(t):
        return 2 * (t * D * in_bytes          # audio tile
                    + E_pad * D * in_bytes    # score tile (resident)
                    + E_pad * 4               # mask (resident)
                    + t * E_pad * 4)          # output tile (f32)

    if frame_tile is None:
        tf = min(512, _round_up(F, 8))
        while tf > 8 and footprint(tf) > 8 * 1024 * 1024:
            tf //= 2
        tf = max(8, _round_up(tf, 8))
    else:
        tf = max(8, _round_up(frame_tile, 8))

    F_pad = _round_up(F, tf)
    if F_pad != F:
        # Zero padding of audio frames: those rows are sliced off at the end.
        audio_embs = jnp.pad(audio_embs, ((0, 0), (0, F_pad - F), (0, 0)))

    grid = (B, F_pad // tf)

    # Only hint a larger scoped-VMEM limit when the resident score tile alone
    # pushes the footprint past the smallest default (v5e: 16 MiB).
    need = footprint(tf)
    vmem_limit = None
    if need > 12 * 1024 * 1024:
        vmem_limit = min(64 * 1024 * 1024, _round_up(need + (2 << 20), 1 << 20))

    out = pl.pallas_call(
        _xattn_kernel,
        out_shape=jax.ShapeDtypeStruct((B, F_pad, E_pad), jnp.float32),
        grid_spec=pltpu.PrefetchScalarGridSpec(
            num_scalar_prefetch=0,
            grid=grid,
            in_specs=[
                # audio: new frame tile each step along axis 1
                pl.BlockSpec((1, tf, D), lambda b, f: (b, f, 0)),
                # score: same block across the frame axis -> stays in VMEM
                pl.BlockSpec((1, E_pad, D), lambda b, f: (b, 0, 0)),
                # mask: same block across the frame axis -> stays in VMEM
                pl.BlockSpec((1, 1, E_pad), lambda b, f: (b, 0, 0)),
            ],
            out_specs=pl.BlockSpec((1, tf, E_pad), lambda b, f: (b, f, 0)),
        ),
        compiler_params=pltpu.CompilerParams(
            # every (batch, frame-tile) grid point is independent -> both axes
            # parallel (lets megacore / v7x dual-TC shard the grid).
            dimension_semantics=("parallel", "parallel"),
            vmem_limit_bytes=vmem_limit,
        ),
    )(audio_embs, score_embs, mask3)

    # Slice padded frames / events back off.
    return out[:, :F, :E]


def _reference(audio_embs, score_embs, x_attn_mask):
    attn = jnp.einsum("bfd,bed->bfe", audio_embs, score_embs)
    attn = jnp.where(x_attn_mask[:, None, :] == 0, -jnp.inf, attn)
    return jax.nn.softmax(attn, axis=-1)


if __name__ == "__main__":
    key = jax.random.PRNGKey(0)
    B, F, E, D = 2, 16, 8, 32  # bsz, num_frames, max_num_events, dim

    k1, k2, k3 = jax.random.split(key, 3)
    audio_embs = jax.random.normal(k1, (B, F, D), dtype=jnp.float32)
    score_embs = jax.random.normal(k2, (B, E, D), dtype=jnp.float32)
    # mask: keep at least one valid event per batch to avoid all -inf rows
    # (an all-masked row is NaN in both the PyTorch module and this kernel).
    x_attn_mask = (jax.random.uniform(k3, (B, E)) > 0.3).astype(jnp.int32)
    x_attn_mask = x_attn_mask.at[:, 0].set(1)

    run = jax.jit(functools.partial(cross_attn_matrix))
    out = run(audio_embs, score_embs, x_attn_mask)
    out = jax.block_until_ready(out)

    ref = _reference(audio_embs, score_embs, x_attn_mask)
    assert out.shape == (B, F, E)
    assert bool(jnp.allclose(out, ref, atol=1e-4, rtol=1e-4)), "mismatch vs reference"

    print("KERNEL_OK")
</pallas_src>

<mosaic_0001>
module attributes {stable_mosaic.version = 11 : i64} {
  func.func @_xattn_kernel(%arg0: i32, %arg1: i32, %arg2: memref<1x16x32xf32, #tpu.memory_space<vmem>>, %arg3: memref<1x128x32xf32, #tpu.memory_space<vmem>>, %arg4: memref<1x1x128xi32, #tpu.memory_space<vmem>>, %arg5: memref<1x16x128xf32, #tpu.memory_space<vmem>>) attributes {dimension_semantics = [#tpu.dimension_semantics<parallel>, #tpu.dimension_semantics<parallel>], iteration_bounds = array<i64: 2, 1>, scalar_prefetch = 0 : i64, scratch_operands = 0 : i64, tpu.core_type = #tpu.core_type<tc>, window_params = [{transform_indices = @transform_0, window_bounds = array<i64: 1, 16, 32>}, {transform_indices = @transform_1, window_bounds = array<i64: 1, 128, 32>}, {transform_indices = @transform_2, window_bounds = array<i64: 1, 1, 128>}, {transform_indices = @transform_3, window_bounds = array<i64: 1, 16, 128>}]} {
    %c0 = arith.constant 0 : index
    %c0_0 = arith.constant 0 : index
    %c0_1 = arith.constant 0 : index
    %0 = vector.load %arg2[%c0, %c0_0, %c0_1] : memref<1x16x32xf32, #tpu.memory_space<vmem>>, vector<1x16x32xf32>
    %1 = vector.shape_cast %0 : vector<1x16x32xf32> to vector<16x32xf32>
    %c0_2 = arith.constant 0 : index
    %c0_3 = arith.constant 0 : index
    %c0_4 = arith.constant 0 : index
    %2 = vector.load %arg3[%c0_2, %c0_3, %c0_4] : memref<1x128x32xf32, #tpu.memory_space<vmem>>, vector<1x128x32xf32>
    %3 = vector.shape_cast %2 : vector<1x128x32xf32> to vector<128x32xf32>
    %c0_5 = arith.constant 0 : index
    %c0_6 = arith.constant 0 : index
    %c0_7 = arith.constant 0 : index
    %4 = vector.load %arg4[%c0_5, %c0_6, %c0_7] : memref<1x1x128xi32, #tpu.memory_space<vmem>>, vector<1x1x128xi32>
    %5 = vector.shape_cast %4 : vector<1x1x128xi32> to vector<1x128xi32>
    %cst = arith.constant dense<0.000000e+00> : vector<16x128xf32>
    %6 = tpu.matmul %1, %3, %cst {dimension_numbers = #tpu.dot_dimension_numbers<[1], [1], [0], [0], [0, 0, 1, 0], [], []>} : vector<16x32xf32>, vector<128x32xf32>, vector<16x128xf32> -> vector<16x128xf32>
    %c0_i32 = arith.constant 0 : i32
    %7 = vector.broadcast %c0_i32 : i32 to vector<1x128xi32>
    %8 = arith.cmpi eq, %5, %7 : vector<1x128xi32>
    %cst_8 = arith.constant 0xFF800000 : f32
    %9 = vector.shape_cast %8 : vector<1x128xi1> to vector<1x128xi1>
    %10 = vector.broadcast %9 : vector<1x128xi1> to vector<16x128xi1>
    %11 = vector.broadcast %cst_8 : f32 to vector<16x128xf32>
    %12 = arith.select %10, %11, %6 : vector<16x128xi1>, vector<16x128xf32>
    %cst_9 = arith.constant dense<0xFF800000> : vector<16xf32>
    %13 = vector.multi_reduction <maximumf>, %12, %cst_9 [1] : vector<16x128xf32> to vector<16xf32>
    %14 = vector.shape_cast %13 : vector<16xf32> to vector<16x1xf32>
    %15 = vector.broadcast %14 : vector<16x1xf32> to vector<16x128xf32>
    %16 = arith.subf %12, %15 : vector<16x128xf32>
    %17 = math.exp %16 : vector<16x128xf32>
    %cst_10 = arith.constant dense<0.000000e+00> : vector<16xf32>
    %18 = vector.multi_reduction <add>, %17, %cst_10 [1] : vector<16x128xf32> to vector<16xf32>
    %19 = vector.shape_cast %18 : vector<16xf32> to vector<16x1xf32>
    %20 = tpu.reciprocal %19 {approx = true} : vector<16x1xf32> -> vector<16x1xf32>
    %21 = arith.mulf %19, %20 : vector<16x1xf32>
    %cst_11 = arith.constant 2.000000e+00 : f32
    %22 = vector.broadcast %cst_11 : f32 to vector<16x1xf32>
    %23 = arith.subf %22, %21 : vector<16x1xf32>
    %24 = arith.mulf %20, %23 : vector<16x1xf32>
    %25 = vector.broadcast %24 : vector<16x1xf32> to vector<16x128xf32>
    %26 = arith.mulf %17, %25 : vector<16x128xf32>
    %c0_12 = arith.constant 0 : index
    %c0_13 = arith.constant 0 : index
    %c0_14 = arith.constant 0 : index
    %27 = vector.load %arg5[%c0_12, %c0_13, %c0_14] : memref<1x16x128xf32, #tpu.memory_space<vmem>>, vector<1x16x128xf32>
    %28 = vector.shape_cast %27 : vector<1x16x128xf32> to vector<16x128xf32>
    %29 = vector.shape_cast %26 : vector<16x128xf32> to vector<1x16x128xf32>
    tpu.vector_store %arg5[%c0_12, %c0_13, %c0_14], %29 {strides = array<i32>} : memref<1x16x128xf32, #tpu.memory_space<vmem>>, vector<1x16x128xf32>,
    return
  }
  func.func @transform_0(%arg0: i32, %arg1: i32) -> (i32, i32, i32) {
    %c0_i32 = arith.constant 0 : i32
    %c0_i32_0 = arith.constant 0 : i32
    return %arg0, %arg1, %c0_i32 : i32, i32, i32
  }
  func.func @transform_1(%arg0: i32, %arg1: i32) -> (i32, i32, i32) {
    %c0_i32 = arith.constant 0 : i32
    %c0_i32_0 = arith.constant 0 : i32
    %c0_i32_1 = arith.constant 0 : i32
    return %arg0, %c0_i32, %c0_i32_0 : i32, i32, i32
  }
  func.func @transform_2(%arg0: i32, %arg1: i32) -> (i32, i32, i32) {
    %c0_i32 = arith.constant 0 : i32
    %c0_i32_0 = arith.constant 0 : i32
    %c0_i32_1 = arith.constant 0 : i32
    return %arg0, %c0_i32, %c0_i32_0 : i32, i32, i32
  }
  func.func @transform_3(%arg0: i32, %arg1: i32) -> (i32, i32, i32) {
    %c0_i32 = arith.constant 0 : i32
    %c0_i32_0 = arith.constant 0 : i32
    return %arg0, %arg1, %c0_i32 : i32, i32, i32
  }
}

</mosaic_0001>

<llo_original>
// kernel: cross_attn_matrix.1
$region0: #{cross_attn_matrix.1}
  #allocation0 [shape = 'u32[]', space=smem, size = 0x4, offset = 0x4, fixed_abs, tag = 'smem constant byte address 0x4 - core index']
  #allocation1 [shape = 'u32[144,128]{1,0:T(1,128)}', space=vmem, size = 0x12000, scoped, tag = 'internal scratch']
  %s0 = inlined_call_operand.vmem [shape: f32[2,16,32], index: 0, kind: input, shape index: {}]
  %s1 = inlined_call_operand.vmem [shape: f32[2,128,32], index: 1, kind: input, shape index: {}]
  %s2 = inlined_call_operand.vmem [shape: s32[2,1,128], index: 2, kind: input, shape index: {}]
  %s3 = inlined_call_operand.vmem [shape: f32[2,16,128], index: 3, kind: output, shape index: {}]
  %s4 = sld [smem:[#allocation0]]
  $region45: #{cross_attn_matrix.1} parent=0
    _
  %s6 = ssub.s32 1, %s4
  %s7 = scalar_select 0, %s6, %s4
  loop: start=0, step=1, limit=4
  $region2: #{cross_attn_matrix.1} parent=0 // loop_pre_header
    _
  $region3: #{cross_attn_matrix.1} parent=0 // loop_header
    %s9 = sphi 0, %s13
    %p10 = scmp.ge.s32.totalorder %s9, 4
    %s16 = sphi 0, %s28
    %s17 = sphi 0, %s24
    %s18 = sphi 0, %s16
    %s19 = sphi 0, %s17
    %s20 = sphi 0, %s18
    %s21 = sphi 0, %s19
    %s33 = sphi 0, %s35
    %s36 = sphi 0, %s33
    %s37 = sphi 0, %s36
    %s53 = sphi 0, %s37
    %s59 = sphi 0, %s61
    %s62 = sphi 0, %s59
    %s63 = sphi 0, %s62
    %s79 = sphi 0, %s63
    %s85 = sphi 0, %s87
    %s88 = sphi 0, %s85
    %s89 = sphi 0, %s88
    %s105 = sphi 0, %s89
    %s113 = sphi 0, %s115
    %s116 = sphi 0, %s113
    %s117 = sphi 0, %s116
    %s133 = sphi 0, %s117
  $region4: #{cross_attn_matrix.1} parent=0 // loop_header_branch
    %12 = sbr.rel (%p10) target = $region8
  $region5: #{cross_attn_matrix.1} parent=0 // loop_body
    %s14 = ssub.s32 %s9, 1
    %s15 = ssub.s32 %s9, 2
    %s22 = sadd.s32 1, %s17
    %p23 = scmp.ge.s32.totalorder %s22, 1
    %s24 = scalar_select %p23, 0, %s22
    %s25 = sadd.s32 1, %s16
    %s26 = scalar_select %p23, %s25, %s16
    %p27 = scmp.ge.s32.totalorder %s26, 2
    %s28 = scalar_select %p27, 0, %s26
    %s29 = ssub.s32 %s16, %s28
    %s30 = ssub.s32 %s17, %s24
    %s31 = sor.u32 %s29, %s30
    %p32 = scmp.eq.s32.totalorder %s31, 0
    %s34 = sadd.s32 %s33, 1
    %s35 = scalar_select %p32, %s33, %s34
    %p38 = pneg %p32
    %p39 = scmp.eq.s32.totalorder %s9, 1
    %p40 = por %p38, %p39
    %p41 = scmp.ne.s32.totalorder %s33, %s36
    %p42 = scmp.eq.s32.totalorder %s9, 0
    %p43 = por %p41, %p42
    %p44 = scmp.ne.s32.totalorder %s33, %s36
    %p45 = scmp.eq.s32.totalorder %s14, 1
    %p46 = por %p44, %p45
    %p47 = scmp.ne.s32.totalorder %s36, %s37
    %p48 = scmp.eq.s32.totalorder %s14, 0
    %p49 = por %p47, %p48
    %p50 = scmp.ne.s32.totalorder %s36, %s37
    %p51 = scmp.eq.s32.totalorder %s15, 1
    %p52 = por %p50, %p51
    %p54 = scmp.ne.s32.totalorder %s37, %s53
    %p55 = scmp.eq.s32.totalorder %s15, 0
    %p56 = por %p54, %p55
    %s57 = ssub.s32 %s16, %s28
    %p58 = scmp.eq.s32.totalorder %s57, 0
    %s60 = sadd.s32 %s59, 1
    %s61 = scalar_select %p58, %s59, %s60
    %p64 = pneg %p58
    %p65 = scmp.eq.s32.totalorder %s9, 1
    %p66 = por %p64, %p65
    %p67 = scmp.ne.s32.totalorder %s59, %s62
    %p68 = scmp.eq.s32.totalorder %s9, 0
    %p69 = por %p67, %p68
    %p70 = scmp.ne.s32.totalorder %s59, %s62
    %p71 = scmp.eq.s32.totalorder %s14, 1
    %p72 = por %p70, %p71
    %p73 = scmp.ne.s32.totalorder %s62, %s63
    %p74 = scmp.eq.s32.totalorder %s14, 0
    %p75 = por %p73, %p74
    %p76 = scmp.ne.s32.totalorder %s62, %s63
    %p77 = scmp.eq.s32.totalorder %s15, 1
    %p78 = por %p76, %p77
    %p80 = scmp.ne.s32.totalorder %s63, %s79
    %p81 = scmp.eq.s32.totalorder %s15, 0
    %p82 = por %p80, %p81
    %s83 = ssub.s32 %s16, %s28
    %p84 = scmp.eq.s32.totalorder %s83, 0
    %s86 = sadd.s32 %s85, 1
    %s87 = scalar_select %p84, %s85, %s86
    %p90 = pneg %p84
    %p91 = scmp.eq.s32.totalorder %s9, 1
    %p92 = por %p90, %p91
    %p93 = scmp.ne.s32.totalorder %s85, %s88
    %p94 = scmp.eq.s32.totalorder %s9, 0
    %p95 = por %p93, %p94
    %p96 = scmp.ne.s32.totalorder %s85, %s88
    %p97 = scmp.eq.s32.totalorder %s14, 1
    %p98 = por %p96, %p97
    %p99 = scmp.ne.s32.totalorder %s88, %s89
    %p100 = scmp.eq.s32.totalorder %s14, 0
    %p101 = por %p99, %p100
    %p102 = scmp.ne.s32.totalorder %s88, %s89
    %p103 = scmp.eq.s32.totalorder %s15, 1
    %p104 = por %p102, %p103
    %p106 = scmp.ne.s32.totalorder %s89, %s105
    %p107 = scmp.eq.s32.totalorder %s15, 0
    %p108 = por %p106, %p107
    %s109 = ssub.s32 %s16, %s28
    %s110 = ssub.s32 %s17, %s24
    %s111 = sor.u32 %s109, %s110
    %p112 = scmp.eq.s32.totalorder %s111, 0
    %s114 = sadd.s32 %s113, 1
    %s115 = scalar_select %p112, %s113, %s114
    %p118 = pneg %p112
    %p119 = scmp.eq.s32.totalorder %s9, 1
    %p120 = por %p118, %p119
    %p121 = scmp.ne.s32.totalorder %s113, %s116
    %p122 = scmp.eq.s32.totalorder %s9, 0
    %p123 = por %p121, %p122
    %p124 = scmp.ne.s32.totalorder %s113, %s116
    %p125 = scmp.eq.s32.totalorder %s14, 1
    %p126 = por %p124, %p125
    %p127 = scmp.ne.s32.totalorder %s116, %s117
    %p128 = scmp.eq.s32.totalorder %s14, 0
    %p129 = por %p127, %p128
    %p130 = scmp.ne.s32.totalorder %s116, %s117
    %p131 = scmp.eq.s32.totalorder %s15, 1
    %p132 = por %p130, %p131
    %p134 = scmp.ne.s32.totalorder %s117, %s133
    %p135 = scmp.eq.s32.totalorder %s15, 0
    %p136 = por %p134, %p135
    %p137 = scmp.le.s32.totalorder 1, %s9
    %p138 = scmp.lt.s32.totalorder %s9, 3
    %p139 = pnand %p137, %p138
    %p140 = pneg %p139
    // Predicated region
    $region9: #{cross_attn_matrix.1} parent=5 // pred_check
      _
    $region10: #{cross_attn_matrix.1} parent=5 // pred_check_branch
      %142 = sbr.rel (%p139) target = $region12
    $region11: #{cross_attn_matrix.1} parent=5 // pred_region
      %s143 = ssub.s32 %s9, 1
    $region12: #{cross_attn_matrix.1} parent=5 // pred_fallthru
      _
    %p144 = scmp.lt.s32.totalorder %s9, 2
    // Predicated region
    $region13: #{cross_attn_matrix.1} parent=5 // pred_check
      %p145 = pneg %p144
    $region14: #{cross_attn_matrix.1} parent=5 // pred_check_branch
      %147 = sbr.rel (%p145) target = $region16
    $region15: #{cross_attn_matrix.1} parent=5 // pred_region
      // Predicated region
      $region17: #{cross_attn_matrix.1} parent=15 // pred_check
        %p148 = pneg %p43
      $region18: #{cross_attn_matrix.1} parent=15 // pred_check_branch
        %150 = sbr.rel (%p148) target = $region20
      $region19: #{cross_attn_matrix.1} parent=15 // pred_region
        %s151 = smul.u32 2, %s17
        %p152 = scmp.lt.s32.totalorder %s16, 1
        %s153 = scalar_select %p152, %s16, 1
        %p154 = scmp.lt.s32.totalorder %s151, 1
        %s155 = scalar_select %p154, %s151, 1
        %s156 = smul.addr %s153, 2
        %s157 = sadd.s32 %s155, %s156
        %s158 = smul.addr %s157, 8
        %s159 = scalar_lea.vmem %s0, %s158
        %s160 = smul.u32 2, %s17
      $region20: #{cross_attn_matrix.1} parent=15 // pred_fallthru
        _
      // Predicated region
      $region21: #{cross_attn_matrix.1} parent=15 // pred_check
        %p161 = pneg %p69
      $region22: #{cross_attn_matrix.1} parent=15 // pred_check_branch
        %163 = sbr.rel (%p161) target = $region24
      $region23: #{cross_attn_matrix.1} parent=15 // pred_region
        %p164 = scmp.lt.s32.totalorder %s16, 1
        %s165 = scalar_select %p164, %s16, 1
        %s166 = smul.addr %s165, 16
        %s167 = smul.addr %s166, 8
        %s168 = scalar_lea.vmem %s1, %s167
      $region24: #{cross_attn_matrix.1} parent=15 // pred_fallthru
        _
      // Predicated region
      $region25: #{cross_attn_matrix.1} parent=15 // pred_check
        %p169 = pneg %p95
      $region26: #{cross_attn_matrix.1} parent=15 // pred_check_branch
        %171 = sbr.rel (%p169) target = $region28
      $region27: #{cross_attn_matrix.1} parent=15 // pred_region
        %p172 = scmp.lt.s32.totalorder %s16, 1
        %s173 = scalar_select %p172, %s16, 1
        %s174 = scalar_lea.vmem %s2, %s173
      $region28: #{cross_attn_matrix.1} parent=15 // pred_fallthru
        _
    $region16: #{cross_attn_matrix.1} parent=5 // pred_fallthru
      _
    %p175 = scmp.le.s32.totalorder 1, %s9
    %p176 = scmp.lt.s32.totalorder %s9, 3
    %p177 = pnand %p175, %p176
    %p178 = pneg %p177
    // Predicated region
    $region29: #{cross_attn_matrix.1} parent=5 // pred_check
      _
    $region30: #{cross_attn_matrix.1} parent=5 // pred_check_branch
      %180 = sbr.rel (%p177) target = $region32
    $region31: #{cross_attn_matrix.1} parent=5 // pred_region
      %s181 = ssub.s32 %s9, 1
      %s182 = smul.u32 2, %s19
      %p183 = scmp.lt.s32.totalorder %s18, 1
      %s184 = scalar_select %p183, %s18, 1
      %p185 = scmp.lt.s32.totalorder %s182, 1
      %s186 = scalar_select %p185, %s182, 1
      %s187 = smul.addr %s184, 2
      %s188 = sadd.s32 %s186, %s187
      %s189 = smul.addr %s188, 8
      %s190 = scalar_lea.vmem %s0, %s189
      %p191 = pneg %p49
      %p192 = pneg %p46
      %p193 = scmp.lt.s32.totalorder %s18, 1
      %s194 = scalar_select %p193, %s18, 1
      %s195 = smul.addr %s194, 16
      %s196 = smul.addr %s195, 8
      %s197 = scalar_lea.vmem %s1, %s196
      %p198 = pneg %p75
      %p199 = pneg %p72
      %p200 = scmp.lt.s32.totalorder %s18, 1
      %s201 = scalar_select %p200, %s18, 1
      %s202 = scalar_lea.vmem %s2, %s201
      %p203 = pneg %p101
      %p204 = pneg %p98
      %p205 = pneg %p129
      %p206 = pneg %p126
      %s207 = smul.u32 2, %s19
      %p208 = scmp.lt.s32.totalorder %s18, 1
      %s209 = scalar_select %p208, %s18, 1
      %p210 = scmp.lt.s32.totalorder %s207, 1
      %s211 = scalar_select %p210, %s207, 1
      %s212 = smul.addr %s209, 2
      %s213 = sadd.s32 %s211, %s212
      %s214 = smul.addr %s213, 8
      %s215 = scalar_lea.vmem %s3, %s214
      %s216 = smul.u32 2, %s19
      %p217 = scmp.lt.s32.totalorder %s18, 1
      %s218 = scalar_select %p217, %s18, 1
      %p219 = scmp.lt.s32.totalorder %s216, 1
      %s220 = scalar_select %p219, %s216, 1
      %s221 = smul.addr %s218, 2
      %s222 = sadd.s32 %s220, %s221
      %s223 = smul.addr %s222, 8
      %s224 = scalar_lea.vmem %s0, %s223
      %s225 = smul.u32 2, %s19
      %p226 = scmp.lt.s32.totalorder %s18, 1
      %s227 = scalar_select %p226, %s18, 1
      %s228 = smul.addr %s227, 16
      %s229 = smul.addr %s228, 8
      %s230 = scalar_lea.vmem %s1, %s229
      %p231 = scmp.lt.s32.totalorder %s18, 1
      %s232 = scalar_select %p231, %s18, 1
      %s233 = scalar_lea.vmem %s2, %s232
      %s234 = smul.u32 2, %s19
      %p235 = scmp.lt.s32.totalorder %s18, 1
      %s236 = scalar_select %p235, %s18, 1
      %p237 = scmp.lt.s32.totalorder %s234, 1
      %s238 = scalar_select %p237, %s234, 1
      %s239 = smul.addr %s236, 2
      %s240 = sadd.s32 %s238, %s239
      %s241 = smul.addr %s240, 8
      %s242 = scalar_lea.vmem %s3, %s241
      %s243 = smul.u32 2, %s19
      %v244 = vld [vmem:[%s224] sm:$0xff]
      %v245 = vld [vmem:[%s224 + $0x8] sm:$0xff]
      %v246 = vld [vmem:[%s230] sm:$0xff]
      %v247 = vld [vmem:[%s230 + $0x8] sm:$0xff]
      %v248 = vld [vmem:[%s230 + $0x10] sm:$0xff]
      %v249 = vld [vmem:[%s230 + $0x18] sm:$0xff]
      %v250 = vld [vmem:[%s230 + $0x20] sm:$0xff]
      %v251 = vld [vmem:[%s230 + $0x28] sm:$0xff]
      %v252 = vld [vmem:[%s230 + $0x30] sm:$0xff]
      %v253 = vld [vmem:[%s230 + $0x38] sm:$0xff]
      %v254 = vld [vmem:[%s230 + $0x40] sm:$0xff]
      %v255 = vld [vmem:[%s230 + $0x48] sm:$0xff]
      %v256 = vld [vmem:[%s230 + $0x50] sm:$0xff]
      %v257 = vld [vmem:[%s230 + $0x58] sm:$0xff]
      %v258 = vld [vmem:[%s230 + $0x60] sm:$0xff]
      %v259 = vld [vmem:[%s230 + $0x68] sm:$0xff]
      %v260 = vld [vmem:[%s230 + $0x70] sm:$0xff]
      %v261 = vld [vmem:[%s230 + $0x78] sm:$0xff]
      %v262 = vld [vmem:[%s233] sm:$0x1]
      %vm263 = vcmask 261120
      %v265 = vsel %vm263, %v244, 0
      %v268 = vsel %vm263, %v245, 0
      %v271 = vsel %vm263, %v246, 0
      %v274 = vsel %vm263, %v247, 0
      %v277 = vsel %vm263, %v248, 0
      %v280 = vsel %vm263, %v249, 0
      %v283 = vsel %vm263, %v250, 0
      %v286 = vsel %vm263, %v251, 0
      %v289 = vsel %vm263, %v252, 0
      %v292 = vsel %vm263, %v253, 0
      %v295 = vsel %vm263, %v254, 0
      %v298 = vsel %vm263, %v255, 0
      %v301 = vsel %vm263, %v256, 0
      %v304 = vsel %vm263, %v257, 0
      %v307 = vsel %vm263, %v258, 0
      %v310 = vsel %vm263, %v259, 0
      %v313 = vsel %vm263, %v260, 0
      %v316 = vsel %vm263, %v261, 0
      %318 = vmatprep.subr.mxu0 0.0
      %319 = vmatpush1.xpose.msra.mxu0 %v316
      %320 = vmatprep.subr.mxu0 0.0
      %321 = vmatpush1.xpose.msra.mxu0 %v313
      %322 = vmatprep.subr.mxu0 0.0
      %323 = vmatpush1.xpose.msra.mxu0 %v310
      %324 = vmatprep.subr.mxu0 0.0
      %325 = vmatpush1.xpose.msra.mxu0 %v307
      %326 = vmatprep.subr.mxu0 0.0
      %327 = vmatpush1.xpose.msra.mxu0 %v304
      %328 = vmatprep.subr.mxu0 0.0
      %329 = vmatpush1.xpose.msra.mxu0 %v301
      %330 = vmatprep.subr.mxu0 0.0
      %331 = vmatpush1.xpose.msra.mxu0 %v298
      %332 = vmatprep.subr.mxu0 0.0
      %333 = vmatpush1.xpose.msra.mxu0 %v295
      %334 = vmatprep.subr.mxu0 0.0
      %335 = vmatpush1.xpose.msra.mxu0 %v292
      %336 = vmatprep.subr.mxu0 0.0
      %337 = vmatpush1.xpose.msra.mxu0 %v289
      %338 = vmatprep.subr.mxu0 0.0
      %339 = vmatpush1.xpose.msra.mxu0 %v286
      %340 = vmatprep.subr.mxu0 0.0
      %341 = vmatpush1.xpose.msra.mxu0 %v283
      %342 = vmatprep.subr.mxu0 0.0
      %343 = vmatpush1.xpose.msra.mxu0 %v280
      %344 = vmatprep.subr.mxu0 0.0
      %345 = vmatpush1.xpose.msra.mxu0 %v277
      %346 = vmatprep.subr.mxu0 0.0
      %347 = vmatpush1.xpose.msra.mxu0 %v274
      %348 = vmatprep.subr.mxu0 0.0
      %349 = vmatpush1.xpose.msra.mxu0 %v271
      %350 = vmatprep.subr.mxu0 0.0
      %351 = vmatpush2.xpose.msra.mxu0 0.0
      %352 = vmatprep.subr.mxu0 0.0
      %353 = vmatpush2.xpose.msra.mxu0 0.0
      %354 = vmatprep.subr.mxu0 0.0
      %355 = vmatpush2.xpose.msra.mxu0 0.0
      %356 = vmatprep.subr.mxu0 0.0
      %357 = vmatpush2.xpose.msra.mxu0 0.0
      %358 = vmatprep.subr.mxu0 0.0
      %359 = vmatpush2.xpose.msra.mxu0 0.0
      %360 = vmatprep.subr.mxu0 0.0
      %361 = vmatpush2.xpose.msra.mxu0 0.0
      %362 = vmatprep.subr.mxu0 0.0
      %363 = vmatpush2.xpose.msra.mxu0 0.0
      %364 = vmatprep.subr.mxu0 0.0
      %365 = vmatpush2.xpose.msra.mxu0 0.0
      %366 = vmatprep.subr.mxu0 0.0
      %367 = vmatpush2.xpose.msra.mxu0 0.0
      %368 = vmatprep.subr.mxu0 0.0
      %369 = vmatpush2.xpose.msra.mxu0 0.0
      %370 = vmatprep.subr.mxu0 0.0
      %371 = vmatpush2.xpose.msra.mxu0 0.0
      %372 = vmatprep.subr.mxu0 0.0
      %373 = vmatpush2.xpose.msra.mxu0 0.0
      %374 = vmatprep.subr.mxu0 0.0
      %375 = vmatpush2.xpose.msra.mxu0 0.0
      %376 = vmatprep.subr.mxu0 0.0
      %377 = vmatpush2.xpose.msra.mxu0 0.0
      %378 = vmatprep.subr.mxu0 0.0
      %379 = vmatpush2.xpose.msra.mxu0 0.0
      %380 = vmatprep.subr.mxu0 0.0
      %381 = vmatpush2.xpose.msra.mxu0 0.0
      %382 = vmatprep.mubr.f32.mxu0 0.0
      %383 = vmatmul.mubr.f32.gmra.mxu0 %v265
      %v384 = vpop.f32.mrf.mxu0
      %v385 = vadd.f32 0.0, %v384
      %v386 = vpop.f32.mrf.mxu0
      %387 = vmatprep.mubr.f32.mxu0 0.0
      %388 = vmatmul.mubr.f32.gmra.mxu0 %v268
      %v389 = vpop.f32.mrf.mxu0
      %v390 = vadd.f32 0.0, %v389
      %v391 = vpop.f32.mrf.mxu0
      %392 = vdwg.mxu0
      %vm393 = vcmp.eq.s32.totalorder %v262, 0
      %v394 = vsel %vm393, 1, 0
      %v395 = vlaneseq
      %v396 = vshrl.u32 %v395, 7
      %v397 = vsub.s32 0, %v396
      %v398 = vrot.slane %v394, %v397
      %vm399 = vcmp.eq.s32.totalorder %v398, 1
      %v400 = vsel %vm399, -inf, %v385
      %v401 = vsel %vm399, -inf, %v390
      %402 = vmax.xlane.f32.xlu0 %v400
      %v403 = vpop.xlane.xlu0 %402
      %404 = vmax.xlane.f32.xlu0 %v401
      %v405 = vpop.xlane.xlu0 %404
      %v406 = vsub.f32 %v400, %v403
      %v407 = vsub.f32 %v401, %v405
      %v408 = vmul.f32 %v406, 1.442695
      %v409 = vpow.pop %v408
      %v410 = vmul.f32 %v407, 1.442695
      %v411 = vpow.pop %v410
      %412 = vadd.xlane.f32.xlu0 %v409
      %v413 = vpop.xlane.xlu0 %412
      %414 = vadd.xlane.f32.xlu0 %v411
      %v415 = vpop.xlane.xlu0 %414
      %v416 = vrcp.pop %v413
      %v417 = vrcp.pop %v415
      %v418 = vmul.f32 %v413, %v416
      %v419 = vmul.f32 %v415, %v417
      %v420 = vsub.f32 2.0, %v418
      %v421 = vsub.f32 2.0, %v419
      %v422 = vmul.f32 %v416, %v420
      %v423 = vmul.f32 %v417, %v421
      %v424 = vmul.f32 %v409, %v422
      %v425 = vmul.f32 %v411, %v423
      %426 = vst [vmem:[%s242] sm:$0xff] %v424
      %427 = vst [vmem:[%s242 + $0x8] sm:$0xff] %v425
      %s428 = smul.u32 2, %s19
      %p429 = scmp.lt.s32.totalorder %s18, 1
      %s430 = scalar_select %p429, %s18, 1
      %p431 = scmp.lt.s32.totalorder %s428, 1
      %s432 = scalar_select %p431, %s428, 1
      %s433 = smul.addr %s430, 2
      %s434 = sadd.s32 %s432, %s433
      %s435 = smul.addr %s434, 8
      %s436 = scalar_lea.vmem %s3, %s435
      // Predicated region
      $region33: #{cross_attn_matrix.1} parent=31 // pred_check
        %p437 = pneg %p126
      $region34: #{cross_attn_matrix.1} parent=31 // pred_check_branch
        %439 = sbr.rel (%p437) target = $region36
      $region35: #{cross_attn_matrix.1} parent=31 // pred_region
        %s440 = smul.u32 2, %s19
      $region36: #{cross_attn_matrix.1} parent=31 // pred_fallthru
        _
    $region32: #{cross_attn_matrix.1} parent=5 // pred_fallthru
      _
    %p441 = scmp.le.s32.totalorder 2, %s9
    // Predicated region
    $region37: #{cross_attn_matrix.1} parent=5 // pred_check
      %p442 = pneg %p441
    $region38: #{cross_attn_matrix.1} parent=5 // pred_check_branch
      %444 = sbr.rel (%p442) target = $region40
    $region39: #{cross_attn_matrix.1} parent=5 // pred_region
      %s445 = ssub.s32 %s9, 2
      // Predicated region
      $region41: #{cross_attn_matrix.1} parent=39 // pred_check
        %p446 = pneg %p132
      $region42: #{cross_attn_matrix.1} parent=39 // pred_check_branch
        %448 = sbr.rel (%p446) target = $region44
      $region43: #{cross_attn_matrix.1} parent=39 // pred_region
        %s449 = smul.u32 2, %s21
        %p450 = scmp.lt.s32.totalorder %s20, 1
        %s451 = scalar_select %p450, %s20, 1
        %p452 = scmp.lt.s32.totalorder %s449, 1
        %s453 = scalar_select %p452, %s449, 1
        %s454 = smul.addr %s451, 2
        %s455 = sadd.s32 %s453, %s454
        %s456 = smul.addr %s455, 8
        %s457 = scalar_lea.vmem %s3, %s456
      $region44: #{cross_attn_matrix.1} parent=39 // pred_fallthru
        _
    $region40: #{cross_attn_matrix.1} parent=5 // pred_fallthru
      _
  $region6: #{cross_attn_matrix.1} parent=0 // loop_footer
    %s13 = sadd.s32 1, %s9
  $region7: #{cross_attn_matrix.1} parent=0 // loop_footer_branch
    %8 = sbr.rel target = $region3
  $region8: #{cross_attn_matrix.1} parent=0 // loop_exit
    _

</llo_original>
